<compile_context>
chip_gen: v6e
topology: v6e:2x2x1
jax: 0.10.0
libtpu: 0.0.40
codegen_flags: <defaults>
</compile_context>

<pallas_src>
import jax
import jax.numpy as jnp
from jax.experimental import pallas as pl
from jax.experimental.pallas import tpu as pltpu


def _attn_pool_kernel(h0_ref, w1_ref, b1_ref, w2_ref, b2_ref, out_ref):
    # h0_ref : (Bt, N, F) f32   node features for a block of Bt graphs
    # w1_ref : (F, D)  b1_ref: (1, D)   fc1 (weights pre-transposed to [in, out])
    # w2_ref : (D, H)  b2_ref: (1, H)   fc2
    # out_ref: (Bt, F)
    bt, n, f = h0_ref.shape
    h0 = h0_ref[...]                                          # (Bt, N, F) f32

    # fc1 + tanh and fc2 as single big matmuls with M = Bt*N rows.
    # Operands are cast to the weight dtype (bf16 on the perf path) at the MXU
    # boundary only; accumulation and all elementwise math stay in f32.
    mm_dtype = w1_ref.dtype
    h0_flat = h0.reshape(bt * n, f)                           # (Bt*N, F)
    z = jnp.tanh(
        jnp.dot(h0_flat.astype(mm_dtype), w1_ref[...],
                preferred_element_type=jnp.float32)
        + b1_ref[...]
    )                                                         # (Bt*N, D) f32
    s = (
        jnp.dot(z.astype(w2_ref.dtype), w2_ref[...],
                preferred_element_type=jnp.float32)
        + b2_ref[...]
    )                                                         # (Bt*N, H) f32

    # Per-graph softmax over the node axis (dgl.softmax_nodes), per head.
    s = s.reshape(bt, n, -1)                                  # (Bt, N, H)
    s = s - jnp.max(s, axis=1, keepdims=True)
    e = jnp.exp(s)
    # Reciprocal of the small (Bt, 1, H) denominator, then broadcast-multiply:
    # avoids an elementwise divide over the full (Bt, N, H) tensor.
    # (approx=False keeps the 1e-5 exactness check intact; layout win is the same.)
    inv = pl.reciprocal(jnp.sum(e, axis=1, keepdims=True), approx=False)

    # Fold the mean over heads into the attention weights:
    #   mean_h(sum_n attn[n,h] * h0[n]) == sum_n (mean_h attn[n,h]) * h0[n]
    w = jnp.mean(e * inv, axis=-1, keepdims=True)             # (Bt, N, 1)

    # Weighted sum over nodes on the VPU (lane-broadcast multiply + reduce).
    pooled = jnp.sum(h0.astype(jnp.float32) * w, axis=1)      # (Bt, F)
    out_ref[...] = pooled.astype(out_ref.dtype)


def _num_tensorcores():
    """Best-effort TensorCore count per device (2 on dual-TC v7x, else 1)."""
    try:
        info = pltpu.get_tpu_info()
        for name in ("num_cores", "core_count", "num_tensor_cores",
                     "tensorcore_count", "num_tensorcores"):
            val = getattr(info, name, None)
            if isinstance(val, int) and val > 0:
                return val
    except Exception:
        pass
    try:
        kind = jax.devices()[0].device_kind.lower()
        if "v7" in kind or "tpu7" in kind:
            return 2
    except Exception:
        pass
    return 1


def _pick_block_batch(B, N, F, itemsize=4, num_cores=1, vmem_budget=8 << 20):
    """Graphs per block: as large as possible, capped only by B, the number of
    TensorCores (one max-size block per core), and a conservative VMEM budget
    for the double-buffered h0 input block."""
    max_bt_vmem = max(1, vmem_budget // (2 * N * F * itemsize))
    bt = min(B, max_bt_vmem)
    if num_cores > 1 and B > 1:
        bt = min(bt, max(1, B // num_cores))   # one block per TensorCore
    while B % bt:
        bt -= 1
    return bt


def attn_pooling(h0, w1, b1, w2, b2, *, block_batch=None,
                 matmul_dtype=jnp.bfloat16):
    """h0: [B, N, F]; w1: [F, D]; b1: [D]; w2: [D, H]; b2: [H] -> [B, F]."""
    B, N, F = h0.shape
    D = w1.shape[1]
    H = w2.shape[1]
    if block_batch is None:
        bt = _pick_block_batch(B, N, F, itemsize=h0.dtype.itemsize,
                               num_cores=_num_tensorcores())
    else:
        bt = block_batch
    assert B % bt == 0

    # MXU operands in matmul_dtype (bf16 by default: native on v6e/v7x, fine on
    # v5e's MXU); biases and all elementwise math remain f32.
    w1c = w1.astype(matmul_dtype)
    w2c = w2.astype(matmul_dtype)
    b1_2d = b1.reshape(1, D).astype(jnp.float32)
    b2_2d = b2.reshape(1, H).astype(jnp.float32)

    # Weights/biases are a few KiB: keep them whole-array resident in VMEM
    # instead of re-pipelining them every grid step.
    vmem = pltpu.MemorySpace.VMEM

    # TODO(synk): real DGL batched graphs have ragged node counts; this dense
    # fixed-N layout assumes no padded nodes. Ragged batches would need
    # per-graph lengths (scalar prefetch) + masking of scores before softmax.
    return pl.pallas_call(
        _attn_pool_kernel,
        out_shape=jax.ShapeDtypeStruct((B, F), h0.dtype),
        grid=(B // bt,),
        in_specs=[
            pl.BlockSpec((bt, N, F), lambda i: (i, 0, 0)),
            pl.BlockSpec(memory_space=vmem),
            pl.BlockSpec(memory_space=vmem),
            pl.BlockSpec(memory_space=vmem),
            pl.BlockSpec(memory_space=vmem),
        ],
        out_specs=pl.BlockSpec((bt, F), lambda i: (i, 0)),
        compiler_params=pltpu.CompilerParams(
            dimension_semantics=("parallel",),
        ),
    )(h0, w1c, b1_2d, w2c, b2_2d)


def _reference(h0, w1, b1, w2, b2):
    z = jnp.tanh(h0 @ w1 + b1)              # (B, N, D)
    s = z @ w2 + b2                         # (B, N, H)
    attn = jax.nn.softmax(s, axis=1)        # softmax over nodes per graph
    pooled = jnp.einsum("bnh,bnf->bhf", attn, h0)
    return jnp.mean(pooled, axis=1)         # (B, F)


if __name__ == "__main__":
    # Small, module-consistent shapes: 16 graphs x 16 nodes, F=D=32, 4 heads.
    B, N = 16, 16
    in_features = 32
    dense_features = 32
    n_heads = 4

    key = jax.random.PRNGKey(0)
    k_h, k_w1, k_b1, k_w2, k_b2 = jax.random.split(key, 5)

    h0 = jax.random.normal(k_h, (B, N, in_features), dtype=jnp.float32)
    # torch Linear parameters, pre-transposed to [in, out].
    w1 = jax.random.normal(k_w1, (in_features, dense_features), jnp.float32) * 0.1
    b1 = jax.random.normal(k_b1, (dense_features,), jnp.float32) * 0.1
    w2 = jax.random.normal(k_w2, (dense_features, n_heads), jnp.float32) * 0.1
    b2 = jax.random.normal(k_b2, (n_heads,), jnp.float32) * 0.1

    ref = _reference(h0, w1, b1, w2, b2)

    # Exactness check: f32 MXU path matches the f32 reference tightly.
    out_f32 = attn_pooling(h0, w1, b1, w2, b2, matmul_dtype=jnp.float32)
    out_f32 = jax.block_until_ready(out_f32)
    assert out_f32.shape == (B, in_features)
    assert jnp.allclose(out_f32, ref, atol=1e-5, rtol=1e-5)

    # Performance config: bf16 MXU operands (v6e/v7x-native), f32 elementwise.
    # Looser tolerance only reflects bf16 rounding of the score path.
    out_bf16 = attn_pooling(h0, w1, b1, w2, b2, matmul_dtype=jnp.bfloat16)
    out_bf16 = jax.block_until_ready(out_bf16)
    assert out_bf16.shape == (B, in_features)
    assert jnp.allclose(out_bf16, ref, atol=2e-2, rtol=2e-2)

    print("KERNEL_OK")
</pallas_src>

<mosaic_0001>
module attributes {stable_mosaic.version = 11 : i64} {
  func.func @_attn_pool_kernel(%arg0: i32, %arg1: memref<16x16x32xf32, #tpu.memory_space<vmem>>, %arg2: memref<32x32xf32, #tpu.memory_space<vmem>>, %arg3: memref<1x32xf32, #tpu.memory_space<vmem>>, %arg4: memref<32x4xf32, #tpu.memory_space<vmem>>, %arg5: memref<1x4xf32, #tpu.memory_space<vmem>>, %arg6: memref<16x32xf32, #tpu.memory_space<vmem>>) attributes {dimension_semantics = [#tpu.dimension_semantics<parallel>], iteration_bounds = array<i64: 1>, scalar_prefetch = 0 : i64, scratch_operands = 0 : i64, tpu.core_type = #tpu.core_type<tc>, window_params = [{transform_indices = @transform_0, window_bounds = array<i64: 16, 16, 32>}, {pipeline_mode = #tpu.pipeline_mode<synchronous>, transform_indices = @transform_1, window_bounds = array<i64: 32, 32>}, {pipeline_mode = #tpu.pipeline_mode<synchronous>, transform_indices = @transform_2, window_bounds = array<i64: 1, 32>}, {pipeline_mode = #tpu.pipeline_mode<synchronous>, transform_indices = @transform_3, window_bounds = array<i64: 32, 4>}, {pipeline_mode = #tpu.pipeline_mode<synchronous>, transform_indices = @transform_4, window_bounds = array<i64: 1, 4>}, {transform_indices = @transform_5, window_bounds = array<i64: 16, 32>}]} {
    %c0 = arith.constant 0 : index
    %c0_0 = arith.constant 0 : index
    %c0_1 = arith.constant 0 : index
    %0 = vector.load %arg1[%c0, %c0_0, %c0_1] : memref<16x16x32xf32, #tpu.memory_space<vmem>>, vector<16x16x32xf32>
    %1 = vector.shape_cast %0 : vector<16x16x32xf32> to vector<256x32xf32>
    %c0_2 = arith.constant 0 : index
    %c0_3 = arith.constant 0 : index
    %2 = vector.load %arg2[%c0_2, %c0_3] : memref<32x32xf32, #tpu.memory_space<vmem>>, vector<32x32xf32>
    %cst = arith.constant dense<0.000000e+00> : vector<256x32xf32>
    %3 = tpu.matmul %1, %2, %cst {dimension_numbers = #tpu.dot_dimension_numbers<[1], [0], [0], [1], [0, 0, 1, 1], [], []>} : vector<256x32xf32>, vector<32x32xf32>, vector<256x32xf32> -> vector<256x32xf32>
    %c0_4 = arith.constant 0 : index
    %c0_5 = arith.constant 0 : index
    %4 = vector.load %arg3[%c0_4, %c0_5] : memref<1x32xf32, #tpu.memory_space<vmem>>, vector<1x32xf32>
    %5 = vector.broadcast %4 : vector<1x32xf32> to vector<256x32xf32>
    %6 = arith.addf %3, %5 : vector<256x32xf32>
    %7 = math.tanh %6 : vector<256x32xf32>
    %c0_6 = arith.constant 0 : index
    %c0_7 = arith.constant 0 : index
    %8 = vector.load %arg4[%c0_6, %c0_7] : memref<32x4xf32, #tpu.memory_space<vmem>>, vector<32x4xf32>
    %cst_8 = arith.constant dense<0.000000e+00> : vector<256x4xf32>
    %9 = tpu.matmul %7, %8, %cst_8 {dimension_numbers = #tpu.dot_dimension_numbers<[1], [0], [0], [1], [0, 0, 1, 1], [], []>} : vector<256x32xf32>, vector<32x4xf32>, vector<256x4xf32> -> vector<256x4xf32>
    %c0_9 = arith.constant 0 : index
    %c0_10 = arith.constant 0 : index
    %10 = vector.load %arg5[%c0_9, %c0_10] : memref<1x4xf32, #tpu.memory_space<vmem>>, vector<1x4xf32>
    %11 = vector.broadcast %10 : vector<1x4xf32> to vector<256x4xf32>
    %12 = arith.addf %9, %11 : vector<256x4xf32>
    %13 = vector.shape_cast %12 : vector<256x4xf32> to vector<16x16x4xf32>
    %cst_11 = arith.constant dense<0xFF800000> : vector<16x4xf32>
    %14 = vector.multi_reduction <maximumf>, %13, %cst_11 [1] : vector<16x16x4xf32> to vector<16x4xf32>
    %15 = vector.shape_cast %14 : vector<16x4xf32> to vector<16x1x4xf32>
    %16 = vector.broadcast %15 : vector<16x1x4xf32> to vector<16x16x4xf32>
    %17 = arith.subf %13, %16 : vector<16x16x4xf32>
    %18 = math.exp %17 : vector<16x16x4xf32>
    %cst_12 = arith.constant dense<0.000000e+00> : vector<16x4xf32>
    %19 = vector.multi_reduction <add>, %18, %cst_12 [1] : vector<16x16x4xf32> to vector<16x4xf32>
    %20 = vector.shape_cast %19 : vector<16x4xf32> to vector<16x1x4xf32>
    %21 = tpu.reciprocal %20 : vector<16x1x4xf32> -> vector<16x1x4xf32>
    %22 = vector.broadcast %21 : vector<16x1x4xf32> to vector<16x16x4xf32>
    %23 = arith.mulf %18, %22 : vector<16x16x4xf32>
    %cst_13 = arith.constant dense<0.000000e+00> : vector<16x16xf32>
    %24 = vector.multi_reduction <add>, %23, %cst_13 [2] : vector<16x16x4xf32> to vector<16x16xf32>
    %25 = vector.shape_cast %24 : vector<16x16xf32> to vector<16x16x1xf32>
    %cst_14 = arith.constant 4.000000e+00 : f32
    %26 = vector.broadcast %cst_14 : f32 to vector<16x16x1xf32>
    %27 = arith.divf %25, %26 : vector<16x16x1xf32>
    %28 = vector.broadcast %27 : vector<16x16x1xf32> to vector<16x16x32xf32>
    %29 = arith.mulf %0, %28 : vector<16x16x32xf32>
    %cst_15 = arith.constant dense<0.000000e+00> : vector<16x32xf32>
    %30 = vector.multi_reduction <add>, %29, %cst_15 [1] : vector<16x16x32xf32> to vector<16x32xf32>
    %c0_16 = arith.constant 0 : index
    %c0_17 = arith.constant 0 : index
    %31 = vector.load %arg6[%c0_16, %c0_17] : memref<16x32xf32, #tpu.memory_space<vmem>>, vector<16x32xf32>
    tpu.vector_store %arg6[%c0_16, %c0_17], %30 {strides = array<i32>} : memref<16x32xf32, #tpu.memory_space<vmem>>, vector<16x32xf32>,
    return
  }
  func.func @transform_0(%arg0: i32) -> (i32, i32, i32) {
    %c0_i32 = arith.constant 0 : i32
    %c0_i32_0 = arith.constant 0 : i32
    %c0_i32_1 = arith.constant 0 : i32
    return %arg0, %c0_i32, %c0_i32_0 : i32, i32, i32
  }
  func.func @transform_1(%arg0: i32) -> (i32, i32) {
    %c0_i32 = arith.constant 0 : i32
    %c0_i32_0 = arith.constant 0 : i32
    %c0_i32_1 = arith.constant 0 : i32
    return %c0_i32, %c0_i32_0 : i32, i32
  }
  func.func @transform_2(%arg0: i32) -> (i32, i32) {
    %c0_i32 = arith.constant 0 : i32
    %c0_i32_0 = arith.constant 0 : i32
    %c0_i32_1 = arith.constant 0 : i32
    return %c0_i32, %c0_i32_0 : i32, i32
  }
  func.func @transform_3(%arg0: i32) -> (i32, i32) {
    %c0_i32 = arith.constant 0 : i32
    %c0_i32_0 = arith.constant 0 : i32
    %c0_i32_1 = arith.constant 0 : i32
    return %c0_i32, %c0_i32_0 : i32, i32
  }
  func.func @transform_4(%arg0: i32) -> (i32, i32) {
    %c0_i32 = arith.constant 0 : i32
    %c0_i32_0 = arith.constant 0 : i32
    %c0_i32_1 = arith.constant 0 : i32
    return %c0_i32, %c0_i32_0 : i32, i32
  }
  func.func @transform_5(%arg0: i32) -> (i32, i32) {
    %c0_i32 = arith.constant 0 : i32
    %c0_i32_0 = arith.constant 0 : i32
    return %arg0, %c0_i32 : i32, i32
  }
}

</mosaic_0001>

<llo_original>
// kernel: tpu_custom_call.1
$region0: #{tpu_custom_call.1}
  #allocation0 [shape = 'u32[]', space=smem, size = 0x4, offset = 0x4, fixed_abs, tag = 'smem constant byte address 0x4 - core index']
  #allocation1 [shape = 'u32[144,128]{1,0:T(1,128)}', space=vmem, size = 0x12000, scoped, tag = 'internal scratch']
  %s0 = inlined_call_operand.hbm [shape: f32[16,16,32], index: 0, kind: input, shape index: {}]
  %s1 = inlined_call_operand.vmem [shape: f32[32,32], index: 1, kind: input, shape index: {}]
  %s2 = inlined_call_operand.vmem [shape: f32[1,32], index: 2, kind: input, shape index: {}]
  %s3 = inlined_call_operand.vmem [shape: f32[32,4], index: 3, kind: input, shape index: {}]
  %s4 = inlined_call_operand.vmem [shape: f32[1,4], index: 4, kind: input, shape index: {}]
  %s5 = inlined_call_operand.hbm [shape: f32[16,32], index: 5, kind: output, shape index: {}]
  %s6 = sld [smem:[#allocation0]]
  $region34: #{tpu_custom_call.1} parent=0
    _
  %s8 = ssub.s32 1, %s6
  %s9 = scalar_select 0, %s8, %s6
  $region1: #{tpu_custom_call.1} parent=0
    #allocation2 [shape = 'u8[131072]{0}', space=vmem, size = 0x20000, scoped, tag = 'input window, operand 0, single buffered']
    #allocation3 [shape = 's32[1]{0}', space=sflag, size = 0x4, scoped, tag = 'scoped memory for tpu_custom_call.1']
    #allocation4 [shape = 's32[1]{0}', space=sflag, size = 0x4, scoped, tag = 'scoped memory for tpu_custom_call.1']
    #allocation5 [shape = 'u8[8192]{0}', space=vmem, size = 0x2000, scoped, tag = 'output window, operand 0, single buffered']
    %10 = vsyncpa [#allocation3], 0
    %11 = vsyncpa [#allocation4], 0
    // Predicated region
    $region2: #{tpu_custom_call.1} parent=1 // pred_check
      _
    $region3: #{tpu_custom_call.1} parent=1 // pred_check_branch
      %13 = sbr.rel (0) target = $region5
    $region4: #{tpu_custom_call.1} parent=1 // pred_region
      %s15 = ssub.s32 4096, 4096
      %16 = vsyncadd [#allocation3], %s15
      %s17 = sshll.u32 [#allocation2], 4
      %s18 = int_to_ptr.vmem [resolvable:$true] %s17
      %23 = dma.hbm_to_vmem [thread:$0]  %s0, 4096, %s18, [#allocation3], 128, 128, 8
    $region5: #{tpu_custom_call.1} parent=1 // pred_fallthru
      _
    // Predicated region
    $region6: #{tpu_custom_call.1} parent=1 // pred_check
      _
    $region7: #{tpu_custom_call.1} parent=1 // pred_check_branch
      %25 = sbr.rel (0) target = $region9
    $region8: #{tpu_custom_call.1} parent=1 // pred_region
      _
    $region9: #{tpu_custom_call.1} parent=1 // pred_fallthru
      _
    // Predicated region
    $region10: #{tpu_custom_call.1} parent=1 // pred_check
      _
    $region11: #{tpu_custom_call.1} parent=1 // pred_check_branch
      %27 = sbr.rel (0) target = $region13
    $region12: #{tpu_custom_call.1} parent=1 // pred_region
      _
    $region13: #{tpu_custom_call.1} parent=1 // pred_fallthru
      _
    // Predicated region
    $region14: #{tpu_custom_call.1} parent=1 // pred_check
      _
    $region15: #{tpu_custom_call.1} parent=1 // pred_check_branch
      %29 = sbr.rel (0) target = $region17
    $region16: #{tpu_custom_call.1} parent=1 // pred_region
      _
    $region17: #{tpu_custom_call.1} parent=1 // pred_fallthru
      _
    // Predicated region
    $region18: #{tpu_custom_call.1} parent=1 // pred_check
      _
    $region19: #{tpu_custom_call.1} parent=1 // pred_check_branch
      %31 = sbr.rel (0) target = $region21
    $region20: #{tpu_custom_call.1} parent=1 // pred_region
      _
    $region21: #{tpu_custom_call.1} parent=1 // pred_fallthru
      _
    // Predicated region
    $region22: #{tpu_custom_call.1} parent=1 // pred_check
      _
    $region23: #{tpu_custom_call.1} parent=1 // pred_check_branch
      %33 = sbr.rel (0) target = $region25
    $region24: #{tpu_custom_call.1} parent=1 // pred_region
      %34 = dma.done [#allocation3], 4096
    $region25: #{tpu_custom_call.1} parent=1 // pred_fallthru
      _
    %v35 = vld [vmem:[#allocation2] sm:$0xff]
    %v36 = vld [vmem:[#allocation2 + $0x8] sm:$0xff]
    %v37 = vld [vmem:[#allocation2 + $0x10] sm:$0xff]
    %v38 = vld [vmem:[#allocation2 + $0x18] sm:$0xff]
    %v39 = vld [vmem:[#allocation2 + $0x20] sm:$0xff]
    %v40 = vld [vmem:[#allocation2 + $0x28] sm:$0xff]
    %v41 = vld [vmem:[#allocation2 + $0x30] sm:$0xff]
    %v42 = vld [vmem:[#allocation2 + $0x38] sm:$0xff]
    %v43 = vld [vmem:[#allocation2 + $0x40] sm:$0xff]
    %v44 = vld [vmem:[#allocation2 + $0x48] sm:$0xff]
    %v45 = vld [vmem:[#allocation2 + $0x50] sm:$0xff]
    %v46 = vld [vmem:[#allocation2 + $0x58] sm:$0xff]
    %v47 = vld [vmem:[#allocation2 + $0x60] sm:$0xff]
    %v48 = vld [vmem:[#allocation2 + $0x68] sm:$0xff]
    %v49 = vld [vmem:[#allocation2 + $0x70] sm:$0xff]
    %v50 = vld [vmem:[#allocation2 + $0x78] sm:$0xff]
    %v51 = vld [vmem:[#allocation2 + $0x80] sm:$0xff]
    %v52 = vld [vmem:[#allocation2 + $0x88] sm:$0xff]
    %v53 = vld [vmem:[#allocation2 + $0x90] sm:$0xff]
    %v54 = vld [vmem:[#allocation2 + $0x98] sm:$0xff]
    %v55 = vld [vmem:[#allocation2 + $0xa0] sm:$0xff]
    %v56 = vld [vmem:[#allocation2 + $0xa8] sm:$0xff]
    %v57 = vld [vmem:[#allocation2 + $0xb0] sm:$0xff]
    %v58 = vld [vmem:[#allocation2 + $0xb8] sm:$0xff]
    %v59 = vld [vmem:[#allocation2 + $0xc0] sm:$0xff]
    %v60 = vld [vmem:[#allocation2 + $0xc8] sm:$0xff]
    %v61 = vld [vmem:[#allocation2 + $0xd0] sm:$0xff]
    %v62 = vld [vmem:[#allocation2 + $0xd8] sm:$0xff]
    %v63 = vld [vmem:[#allocation2 + $0xe0] sm:$0xff]
    %v64 = vld [vmem:[#allocation2 + $0xe8] sm:$0xff]
    %v65 = vld [vmem:[#allocation2 + $0xf0] sm:$0xff]
    %v66 = vld [vmem:[#allocation2 + $0xf8] sm:$0xff]
    %v67 = vld [vmem:[%s1] sm:$0xff]
    %v68 = vld [vmem:[%s1 + $0x8] sm:$0xff]
    %v69 = vld [vmem:[%s1 + $0x10] sm:$0xff]
    %v70 = vld [vmem:[%s1 + $0x18] sm:$0xff]
    %v71 = vld [vmem:[%s2] sm:$0x1]
    %v73 = vlaneseq
    %v74 = vshrl.u32 %v73, 7
    %v75 = vsub.s32 0, %v74
    %v76 = vrot.slane %v71, %v75
    %vm78 = vcmask 261120
    %v80 = vsel %vm78, %v35, 0
    %v83 = vsel %vm78, %v36, 0
    %v86 = vsel %vm78, %v37, 0
    %v89 = vsel %vm78, %v38, 0
    %v92 = vsel %vm78, %v39, 0
    %v95 = vsel %vm78, %v40, 0
    %v98 = vsel %vm78, %v41, 0
    %v101 = vsel %vm78, %v42, 0
    %v104 = vsel %vm78, %v43, 0
    %v107 = vsel %vm78, %v44, 0
    %v110 = vsel %vm78, %v45, 0
    %v113 = vsel %vm78, %v46, 0
    %v116 = vsel %vm78, %v47, 0
    %v119 = vsel %vm78, %v48, 0
    %v122 = vsel %vm78, %v49, 0
    %v125 = vsel %vm78, %v50, 0
    %v128 = vsel %vm78, %v51, 0
    %v131 = vsel %vm78, %v52, 0
    %v134 = vsel %vm78, %v53, 0
    %v137 = vsel %vm78, %v54, 0
    %v140 = vsel %vm78, %v55, 0
    %v143 = vsel %vm78, %v56, 0
    %v146 = vsel %vm78, %v57, 0
    %v149 = vsel %vm78, %v58, 0
    %v152 = vsel %vm78, %v59, 0
    %v155 = vsel %vm78, %v60, 0
    %v158 = vsel %vm78, %v61, 0
    %v161 = vsel %vm78, %v62, 0
    %v164 = vsel %vm78, %v63, 0
    %v167 = vsel %vm78, %v64, 0
    %v170 = vsel %vm78, %v65, 0
    %v173 = vsel %vm78, %v66, 0
    %175 = vmatprep.subr.mxu0 0.0
    %176 = vmatpush1.msra.mxu0 0.0
    %177 = vmatprep.subr.mxu0 0.0
    %178 = vmatpush1.msra.mxu0 0.0
    %179 = vmatprep.subr.mxu0 0.0
    %180 = vmatpush1.msra.mxu0 0.0
    %181 = vmatprep.subr.mxu0 0.0
    %182 = vmatpush1.msra.mxu0 0.0
    %183 = vmatprep.subr.mxu0 0.0
    %184 = vmatpush1.msra.mxu0 0.0
    %185 = vmatprep.subr.mxu0 0.0
    %186 = vmatpush1.msra.mxu0 0.0
    %187 = vmatprep.subr.mxu0 0.0
    %188 = vmatpush1.msra.mxu0 0.0
    %189 = vmatprep.subr.mxu0 0.0
    %190 = vmatpush1.msra.mxu0 0.0
    %191 = vmatprep.subr.mxu0 0.0
    %192 = vmatpush1.msra.mxu0 0.0
    %193 = vmatprep.subr.mxu0 0.0
    %194 = vmatpush1.msra.mxu0 0.0
    %195 = vmatprep.subr.mxu0 0.0
    %196 = vmatpush1.msra.mxu0 0.0
    %197 = vmatprep.subr.mxu0 0.0
    %198 = vmatpush1.msra.mxu0 0.0
    %199 = vmatprep.subr.mxu0 0.0
    %200 = vmatpush1.msra.mxu0 %v70
    %201 = vmatprep.subr.mxu0 0.0
    %202 = vmatpush1.msra.mxu0 %v69
    %203 = vmatprep.subr.mxu0 0.0
    %204 = vmatpush1.msra.mxu0 %v68
    %205 = vmatprep.subr.mxu0 0.0
    %206 = vmatpush1.msra.mxu0 %v67
    %207 = vmatprep.subr.mxu0 0.0
    %208 = vmatpush2.msra.mxu0 0.0
    %209 = vmatprep.subr.mxu0 0.0
    %210 = vmatpush2.msra.mxu0 0.0
    %211 = vmatprep.subr.mxu0 0.0
    %212 = vmatpush2.msra.mxu0 0.0
    %213 = vmatprep.subr.mxu0 0.0
    %214 = vmatpush2.msra.mxu0 0.0
    %215 = vmatprep.subr.mxu0 0.0
    %216 = vmatpush2.msra.mxu0 0.0
    %217 = vmatprep.subr.mxu0 0.0
    %218 = vmatpush2.msra.mxu0 0.0
    %219 = vmatprep.subr.mxu0 0.0
    %220 = vmatpush2.msra.mxu0 0.0
    %221 = vmatprep.subr.mxu0 0.0
    %222 = vmatpush2.msra.mxu0 0.0
    %223 = vmatprep.subr.mxu0 0.0
    %224 = vmatpush2.msra.mxu0 0.0
    %225 = vmatprep.subr.mxu0 0.0
    %226 = vmatpush2.msra.mxu0 0.0
    %227 = vmatprep.subr.mxu0 0.0
    %228 = vmatpush2.msra.mxu0 0.0
    %229 = vmatprep.subr.mxu0 0.0
    %230 = vmatpush2.msra.mxu0 0.0
    %231 = vmatprep.subr.mxu0 0.0
    %232 = vmatpush2.msra.mxu0 0.0
    %233 = vmatprep.subr.mxu0 0.0
    %234 = vmatpush2.msra.mxu0 0.0
    %235 = vmatprep.subr.mxu0 0.0
    %236 = vmatpush2.msra.mxu0 0.0
    %237 = vmatprep.subr.mxu0 0.0
    %238 = vmatpush2.msra.mxu0 0.0
    %239 = vmatprep.mubr.f32.mxu0 0.0
    %240 = vmatmul.mubr.f32.gmra.mxu0 %v80
    %v241 = vpop.f32.mrf.mxu0
    %v242 = vadd.f32 %v76, %v241
    %v243 = vpop.f32.mrf.mxu0
    %244 = vmatprep.mubr.f32.mxu0 0.0
    %245 = vmatmul.mubr.f32.gmra.mxu0 %v83
    %v246 = vpop.f32.mrf.mxu0
    %v247 = vadd.f32 %v76, %v246
    %v248 = vpop.f32.mrf.mxu0
    %249 = vmatprep.mubr.f32.mxu0 0.0
    %250 = vmatmul.mubr.f32.gmra.mxu0 %v86
    %v251 = vpop.f32.mrf.mxu0
    %v252 = vadd.f32 %v76, %v251
    %v253 = vpop.f32.mrf.mxu0
    %254 = vmatprep.mubr.f32.mxu0 0.0
    %255 = vmatmul.mubr.f32.gmra.mxu0 %v89
    %v256 = vpop.f32.mrf.mxu0
    %v257 = vadd.f32 %v76, %v256
    %v258 = vpop.f32.mrf.mxu0
    %259 = vmatprep.mubr.f32.mxu0 0.0
    %260 = vmatmul.mubr.f32.gmra.mxu0 %v92
    %v261 = vpop.f32.mrf.mxu0
    %v262 = vadd.f32 %v76, %v261
    %v263 = vpop.f32.mrf.mxu0
    %264 = vmatprep.mubr.f32.mxu0 0.0
    %265 = vmatmul.mubr.f32.gmra.mxu0 %v95
    %v266 = vpop.f32.mrf.mxu0
    %v267 = vadd.f32 %v76, %v266
    %v268 = vpop.f32.mrf.mxu0
    %269 = vmatprep.mubr.f32.mxu0 0.0
    %270 = vmatmul.mubr.f32.gmra.mxu0 %v98
    %v271 = vpop.f32.mrf.mxu0
    %v272 = vadd.f32 %v76, %v271
    %v273 = vpop.f32.mrf.mxu0
    %274 = vmatprep.mubr.f32.mxu0 0.0
    %275 = vmatmul.mubr.f32.gmra.mxu0 %v101
    %v276 = vpop.f32.mrf.mxu0
    %v277 = vadd.f32 %v76, %v276
    %v278 = vpop.f32.mrf.mxu0
    %279 = vmatprep.mubr.f32.mxu0 0.0
    %280 = vmatmul.mubr.f32.gmra.mxu0 %v104
    %v281 = vpop.f32.mrf.mxu0
    %v282 = vadd.f32 %v76, %v281
    %v283 = vpop.f32.mrf.mxu0
    %284 = vmatprep.mubr.f32.mxu0 0.0
    %285 = vmatmul.mubr.f32.gmra.mxu0 %v107
    %v286 = vpop.f32.mrf.mxu0
    %v287 = vadd.f32 %v76, %v286
    %v288 = vpop.f32.mrf.mxu0
    %289 = vmatprep.mubr.f32.mxu0 0.0
    %290 = vmatmul.mubr.f32.gmra.mxu0 %v110
    %v291 = vpop.f32.mrf.mxu0
    %v292 = vadd.f32 %v76, %v291
    %v293 = vpop.f32.mrf.mxu0
    %294 = vmatprep.mubr.f32.mxu0 0.0
    %295 = vmatmul.mubr.f32.gmra.mxu0 %v113
    %v296 = vpop.f32.mrf.mxu0
    %v297 = vadd.f32 %v76, %v296
    %v298 = vpop.f32.mrf.mxu0
    %299 = vmatprep.mubr.f32.mxu0 0.0
    %300 = vmatmul.mubr.f32.gmra.mxu0 %v116
    %v301 = vpop.f32.mrf.mxu0
    %v302 = vadd.f32 %v76, %v301
    %v303 = vpop.f32.mrf.mxu0
    %304 = vmatprep.mubr.f32.mxu0 0.0
    %305 = vmatmul.mubr.f32.gmra.mxu0 %v119
    %v306 = vpop.f32.mrf.mxu0
    %v307 = vadd.f32 %v76, %v306
    %v308 = vpop.f32.mrf.mxu0
    %309 = vmatprep.mubr.f32.mxu0 0.0
    %310 = vmatmul.mubr.f32.gmra.mxu0 %v122
    %v311 = vpop.f32.mrf.mxu0
    %v312 = vadd.f32 %v76, %v311
    %v313 = vpop.f32.mrf.mxu0
    %314 = vmatprep.mubr.f32.mxu0 0.0
    %315 = vmatmul.mubr.f32.gmra.mxu0 %v125
    %v316 = vpop.f32.mrf.mxu0
    %v317 = vadd.f32 %v76, %v316
    %v318 = vpop.f32.mrf.mxu0
    %319 = vmatprep.mubr.f32.mxu0 0.0
    %320 = vmatmul.mubr.f32.gmra.mxu0 %v128
    %v321 = vpop.f32.mrf.mxu0
    %v322 = vadd.f32 %v76, %v321
    %v323 = vpop.f32.mrf.mxu0
    %324 = vmatprep.mubr.f32.mxu0 0.0
    %325 = vmatmul.mubr.f32.gmra.mxu0 %v131
    %v326 = vpop.f32.mrf.mxu0
    %v327 = vadd.f32 %v76, %v326
    %v328 = vpop.f32.mrf.mxu0
    %329 = vmatprep.mubr.f32.mxu0 0.0
    %330 = vmatmul.mubr.f32.gmra.mxu0 %v134
    %v331 = vpop.f32.mrf.mxu0
    %v332 = vadd.f32 %v76, %v331
    %v333 = vpop.f32.mrf.mxu0
    %334 = vmatprep.mubr.f32.mxu0 0.0
    %335 = vmatmul.mubr.f32.gmra.mxu0 %v137
    %v336 = vpop.f32.mrf.mxu0
    %v337 = vadd.f32 %v76, %v336
    %v338 = vpop.f32.mrf.mxu0
    %339 = vmatprep.mubr.f32.mxu0 0.0
    %340 = vmatmul.mubr.f32.gmra.mxu0 %v140
    %v341 = vpop.f32.mrf.mxu0
    %v342 = vadd.f32 %v76, %v341
    %v343 = vpop.f32.mrf.mxu0
    %344 = vmatprep.mubr.f32.mxu0 0.0
    %345 = vmatmul.mubr.f32.gmra.mxu0 %v143
    %v346 = vpop.f32.mrf.mxu0
    %v347 = vadd.f32 %v76, %v346
    %v348 = vpop.f32.mrf.mxu0
    %349 = vmatprep.mubr.f32.mxu0 0.0
    %350 = vmatmul.mubr.f32.gmra.mxu0 %v146
    %v351 = vpop.f32.mrf.mxu0
    %v352 = vadd.f32 %v76, %v351
    %v353 = vpop.f32.mrf.mxu0
    %354 = vmatprep.mubr.f32.mxu0 0.0
    %355 = vmatmul.mubr.f32.gmra.mxu0 %v149
    %v356 = vpop.f32.mrf.mxu0
    %v357 = vadd.f32 %v76, %v356
    %v358 = vpop.f32.mrf.mxu0
    %359 = vmatprep.mubr.f32.mxu0 0.0
    %360 = vmatmul.mubr.f32.gmra.mxu0 %v152
    %v361 = vpop.f32.mrf.mxu0
    %v362 = vadd.f32 %v76, %v361
    %v363 = vpop.f32.mrf.mxu0
    %364 = vmatprep.mubr.f32.mxu0 0.0
    %365 = vmatmul.mubr.f32.gmra.mxu0 %v155
    %v366 = vpop.f32.mrf.mxu0
    %v367 = vadd.f32 %v76, %v366
    %v368 = vpop.f32.mrf.mxu0
    %369 = vmatprep.mubr.f32.mxu0 0.0
    %370 = vmatmul.mubr.f32.gmra.mxu0 %v158
    %v371 = vpop.f32.mrf.mxu0
    %v372 = vadd.f32 %v76, %v371
    %v373 = vpop.f32.mrf.mxu0
    %374 = vmatprep.mubr.f32.mxu0 0.0
    %375 = vmatmul.mubr.f32.gmra.mxu0 %v161
    %v376 = vpop.f32.mrf.mxu0
    %v377 = vadd.f32 %v76, %v376
    %v378 = vpop.f32.mrf.mxu0
    %379 = vmatprep.mubr.f32.mxu0 0.0
    %380 = vmatmul.mubr.f32.gmra.mxu0 %v164
    %v381 = vpop.f32.mrf.mxu0
    %v382 = vadd.f32 %v76, %v381
    %v383 = vpop.f32.mrf.mxu0
    %384 = vmatprep.mubr.f32.mxu0 0.0
    %385 = vmatmul.mubr.f32.gmra.mxu0 %v167
    %v386 = vpop.f32.mrf.mxu0
    %v387 = vadd.f32 %v76, %v386
    %v388 = vpop.f32.mrf.mxu0
    %389 = vmatprep.mubr.f32.mxu0 0.0
    %390 = vmatmul.mubr.f32.gmra.mxu0 %v170
    %v391 = vpop.f32.mrf.mxu0
    %v392 = vadd.f32 %v76, %v391
    %v393 = vpop.f32.mrf.mxu0
    %394 = vmatprep.mubr.f32.mxu0 0.0
    %395 = vmatmul.mubr.f32.gmra.mxu0 %v173
    %v396 = vpop.f32.mrf.mxu0
    %v397 = vadd.f32 %v76, %v396
    %v398 = vpop.f32.mrf.mxu0
    %399 = vdwg.mxu0
    %v400 = vtanh.pop %v242
    %v401 = vtanh.pop %v247
    %v402 = vtanh.pop %v252
    %v403 = vtanh.pop %v257
    %v404 = vtanh.pop %v262
    %v405 = vtanh.pop %v267
    %v406 = vtanh.pop %v272
    %v407 = vtanh.pop %v277
    %v408 = vtanh.pop %v282
    %v409 = vtanh.pop %v287
    %v410 = vtanh.pop %v292
    %v411 = vtanh.pop %v297
    %v412 = vtanh.pop %v302
    %v413 = vtanh.pop %v307
    %v414 = vtanh.pop %v312
    %v415 = vtanh.pop %v317
    %v416 = vtanh.pop %v322
    %v417 = vtanh.pop %v327
    %v418 = vtanh.pop %v332
    %v419 = vtanh.pop %v337
    %v420 = vtanh.pop %v342
    %v421 = vtanh.pop %v347
    %v422 = vtanh.pop %v352
    %v423 = vtanh.pop %v357
    %v424 = vtanh.pop %v362
    %v425 = vtanh.pop %v367
    %v426 = vtanh.pop %v372
    %v427 = vtanh.pop %v377
    %v428 = vtanh.pop %v382
    %v429 = vtanh.pop %v387
    %v430 = vtanh.pop %v392
    %v431 = vtanh.pop %v397
    %v432 = vld [vmem:[%s3] sm:$0xff]
    %v433 = vld [vmem:[%s3 + $0x8] sm:$0xff]
    %v434 = vld [vmem:[%s3 + $0x10] sm:$0xff]
    %v435 = vld [vmem:[%s3 + $0x18] sm:$0xff]
    %v436 = vld [vmem:[%s4] sm:$0x1]
    %v438 = vlaneseq
    %v439 = vshrl.u32 %v438, 7
    %v440 = vsub.s32 0, %v439
    %v441 = vrot.slane %v436, %v440
    %v444 = vsel %vm78, %v400, 0
    %v447 = vsel %vm78, %v401, 0
    %v450 = vsel %vm78, %v402, 0
    %v453 = vsel %vm78, %v403, 0
    %v456 = vsel %vm78, %v404, 0
    %v459 = vsel %vm78, %v405, 0
    %v462 = vsel %vm78, %v406, 0
    %v465 = vsel %vm78, %v407, 0
    %v468 = vsel %vm78, %v408, 0
    %v471 = vsel %vm78, %v409, 0
    %v474 = vsel %vm78, %v410, 0
    %v477 = vsel %vm78, %v411, 0
    %v480 = vsel %vm78, %v412, 0
    %v483 = vsel %vm78, %v413, 0
    %v486 = vsel %vm78, %v414, 0
    %v489 = vsel %vm78, %v415, 0
    %v492 = vsel %vm78, %v416, 0
    %v495 = vsel %vm78, %v417, 0
    %v498 = vsel %vm78, %v418, 0
    %v501 = vsel %vm78, %v419, 0
    %v504 = vsel %vm78, %v420, 0
    %v507 = vsel %vm78, %v421, 0
    %v510 = vsel %vm78, %v422, 0
    %v513 = vsel %vm78, %v423, 0
    %v516 = vsel %vm78, %v424, 0
    %v519 = vsel %vm78, %v425, 0
    %v522 = vsel %vm78, %v426, 0
    %v525 = vsel %vm78, %v427, 0
    %v528 = vsel %vm78, %v428, 0
    %v531 = vsel %vm78, %v429, 0
    %v534 = vsel %vm78, %v430, 0
    %v537 = vsel %vm78, %v431, 0
    %539 = vmatprep.subr.mxu0 0.0
    %540 = vmatpush1.msra.mxu0 0.0
    %541 = vmatprep.subr.mxu0 0.0
    %542 = vmatpush1.msra.mxu0 0.0
    %543 = vmatprep.subr.mxu0 0.0
    %544 = vmatpush1.msra.mxu0 0.0
    %545 = vmatprep.subr.mxu0 0.0
    %546 = vmatpush1.msra.mxu0 0.0
    %547 = vmatprep.subr.mxu0 0.0
    %548 = vmatpush1.msra.mxu0 0.0
    %549 = vmatprep.subr.mxu0 0.0
    %550 = vmatpush1.msra.mxu0 0.0
    %551 = vmatprep.subr.mxu0 0.0
    %552 = vmatpush1.msra.mxu0 0.0
    %553 = vmatprep.subr.mxu0 0.0
    %554 = vmatpush1.msra.mxu0 0.0
    %555 = vmatprep.subr.mxu0 0.0
    %556 = vmatpush1.msra.mxu0 0.0
    %557 = vmatprep.subr.mxu0 0.0
    %558 = vmatpush1.msra.mxu0 0.0
    %559 = vmatprep.subr.mxu0 0.0
    %560 = vmatpush1.msra.mxu0 0.0
    %561 = vmatprep.subr.mxu0 0.0
    %562 = vmatpush1.msra.mxu0 0.0
    %563 = vmatprep.subr.mxu0 0.0
    %564 = vmatpush1.msra.mxu0 %v435
    %565 = vmatprep.subr.mxu0 0.0
    %566 = vmatpush1.msra.mxu0 %v434
    %567 = vmatprep.subr.mxu0 0.0
    %568 = vmatpush1.msra.mxu0 %v433
    %569 = vmatprep.subr.mxu0 0.0
    %570 = vmatpush1.msra.mxu0 %v432
    %571 = vmatprep.subr.mxu0 0.0
    %572 = vmatpush2.msra.mxu0 0.0
    %573 = vmatprep.subr.mxu0 0.0
    %574 = vmatpush2.msra.mxu0 0.0
    %575 = vmatprep.subr.mxu0 0.0
    %576 = vmatpush2.msra.mxu0 0.0
    %577 = vmatprep.subr.mxu0 0.0
    %578 = vmatpush2.msra.mxu0 0.0
    %579 = vmatprep.subr.mxu0 0.0
    %580 = vmatpush2.msra.mxu0 0.0
    %581 = vmatprep.subr.mxu0 0.0
    %582 = vmatpush2.msra.mxu0 0.0
    %583 = vmatprep.subr.mxu0 0.0
    %584 = vmatpush2.msra.mxu0 0.0
    %585 = vmatprep.subr.mxu0 0.0
    %586 = vmatpush2.msra.mxu0 0.0
    %587 = vmatprep.subr.mxu0 0.0
    %588 = vmatpush2.msra.mxu0 0.0
    %589 = vmatprep.subr.mxu0 0.0
    %590 = vmatpush2.msra.mxu0 0.0
    %591 = vmatprep.subr.mxu0 0.0
    %592 = vmatpush2.msra.mxu0 0.0
    %593 = vmatprep.subr.mxu0 0.0
    %594 = vmatpush2.msra.mxu0 0.0
    %595 = vmatprep.subr.mxu0 0.0
    %596 = vmatpush2.msra.mxu0 0.0
    %597 = vmatprep.subr.mxu0 0.0
    %598 = vmatpush2.msra.mxu0 0.0
    %599 = vmatprep.subr.mxu0 0.0
    %600 = vmatpush2.msra.mxu0 0.0
    %601 = vmatprep.subr.mxu0 0.0
    %602 = vmatpush2.msra.mxu0 0.0
    %603 = vmatprep.mubr.f32.mxu0 0.0
    %604 = vmatmul.mubr.f32.gmra.mxu0 %v444
    %v605 = vpop.f32.mrf.mxu0
    %v606 = vadd.f32 %v441, %v605
    %v607 = vpop.f32.mrf.mxu0
    %608 = vmatprep.mubr.f32.mxu0 0.0
    %609 = vmatmul.mubr.f32.gmra.mxu0 %v447
    %v610 = vpop.f32.mrf.mxu0
    %v611 = vadd.f32 %v441, %v610
    %v612 = vpop.f32.mrf.mxu0
    %613 = vmatprep.mubr.f32.mxu0 0.0
    %614 = vmatmul.mubr.f32.gmra.mxu0 %v450
    %v615 = vpop.f32.mrf.mxu0
    %v616 = vadd.f32 %v441, %v615
    %v617 = vpop.f32.mrf.mxu0
    %618 = vmatprep.mubr.f32.mxu0 0.0
    %619 = vmatmul.mubr.f32.gmra.mxu0 %v453
    %v620 = vpop.f32.mrf.mxu0
    %v621 = vadd.f32 %v441, %v620
    %v622 = vpop.f32.mrf.mxu0
    %623 = vmatprep.mubr.f32.mxu0 0.0
    %624 = vmatmul.mubr.f32.gmra.mxu0 %v456
    %v625 = vpop.f32.mrf.mxu0
    %v626 = vadd.f32 %v441, %v625
    %v627 = vpop.f32.mrf.mxu0
    %628 = vmatprep.mubr.f32.mxu0 0.0
    %629 = vmatmul.mubr.f32.gmra.mxu0 %v459
    %v630 = vpop.f32.mrf.mxu0
    %v631 = vadd.f32 %v441, %v630
    %v632 = vpop.f32.mrf.mxu0
    %633 = vmatprep.mubr.f32.mxu0 0.0
    %634 = vmatmul.mubr.f32.gmra.mxu0 %v462
    %v635 = vpop.f32.mrf.mxu0
    %v636 = vadd.f32 %v441, %v635
    %v637 = vpop.f32.mrf.mxu0
    %638 = vmatprep.mubr.f32.mxu0 0.0
    %639 = vmatmul.mubr.f32.gmra.mxu0 %v465
    %v640 = vpop.f32.mrf.mxu0
    %v641 = vadd.f32 %v441, %v640
    %v642 = vpop.f32.mrf.mxu0
    %643 = vmatprep.mubr.f32.mxu0 0.0
    %644 = vmatmul.mubr.f32.gmra.mxu0 %v468
    %v645 = vpop.f32.mrf.mxu0
    %v646 = vadd.f32 %v441, %v645
    %v647 = vpop.f32.mrf.mxu0
    %648 = vmatprep.mubr.f32.mxu0 0.0
    %649 = vmatmul.mubr.f32.gmra.mxu0 %v471
    %v650 = vpop.f32.mrf.mxu0
    %v651 = vadd.f32 %v441, %v650
    %v652 = vpop.f32.mrf.mxu0
    %653 = vmatprep.mubr.f32.mxu0 0.0
    %654 = vmatmul.mubr.f32.gmra.mxu0 %v474
    %v655 = vpop.f32.mrf.mxu0
    %v656 = vadd.f32 %v441, %v655
    %v657 = vpop.f32.mrf.mxu0
    %658 = vmatprep.mubr.f32.mxu0 0.0
    %659 = vmatmul.mubr.f32.gmra.mxu0 %v477
    %v660 = vpop.f32.mrf.mxu0
    %v661 = vadd.f32 %v441, %v660
    %v662 = vpop.f32.mrf.mxu0
    %663 = vmatprep.mubr.f32.mxu0 0.0
    %664 = vmatmul.mubr.f32.gmra.mxu0 %v480
    %v665 = vpop.f32.mrf.mxu0
    %v666 = vadd.f32 %v441, %v665
    %v667 = vpop.f32.mrf.mxu0
    %668 = vmatprep.mubr.f32.mxu0 0.0
    %669 = vmatmul.mubr.f32.gmra.mxu0 %v483
    %v670 = vpop.f32.mrf.mxu0
    %v671 = vadd.f32 %v441, %v670
    %v672 = vpop.f32.mrf.mxu0
    %673 = vmatprep.mubr.f32.mxu0 0.0
    %674 = vmatmul.mubr.f32.gmra.mxu0 %v486
    %v675 = vpop.f32.mrf.mxu0
    %v676 = vadd.f32 %v441, %v675
    %v677 = vpop.f32.mrf.mxu0
    %678 = vmatprep.mubr.f32.mxu0 0.0
    %679 = vmatmul.mubr.f32.gmra.mxu0 %v489
    %v680 = vpop.f32.mrf.mxu0
    %v681 = vadd.f32 %v441, %v680
    %v682 = vpop.f32.mrf.mxu0
    %683 = vmatprep.mubr.f32.mxu0 0.0
    %684 = vmatmul.mubr.f32.gmra.mxu0 %v492
    %v685 = vpop.f32.mrf.mxu0
    %v686 = vadd.f32 %v441, %v685
    %v687 = vpop.f32.mrf.mxu0
    %688 = vmatprep.mubr.f32.mxu0 0.0
    %689 = vmatmul.mubr.f32.gmra.mxu0 %v495
    %v690 = vpop.f32.mrf.mxu0
    %v691 = vadd.f32 %v441, %v690
    %v692 = vpop.f32.mrf.mxu0
    %693 = vmatprep.mubr.f32.mxu0 0.0
    %694 = vmatmul.mubr.f32.gmra.mxu0 %v498
    %v695 = vpop.f32.mrf.mxu0
    %v696 = vadd.f32 %v441, %v695
    %v697 = vpop.f32.mrf.mxu0
    %698 = vmatprep.mubr.f32.mxu0 0.0
    %699 = vmatmul.mubr.f32.gmra.mxu0 %v501
    %v700 = vpop.f32.mrf.mxu0
    %v701 = vadd.f32 %v441, %v700
    %v702 = vpop.f32.mrf.mxu0
    %703 = vmatprep.mubr.f32.mxu0 0.0
    %704 = vmatmul.mubr.f32.gmra.mxu0 %v504
    %v705 = vpop.f32.mrf.mxu0
    %v706 = vadd.f32 %v441, %v705
    %v707 = vpop.f32.mrf.mxu0
    %708 = vmatprep.mubr.f32.mxu0 0.0
    %709 = vmatmul.mubr.f32.gmra.mxu0 %v507
    %v710 = vpop.f32.mrf.mxu0
    %v711 = vadd.f32 %v441, %v710
    %v712 = vpop.f32.mrf.mxu0
    %713 = vmatprep.mubr.f32.mxu0 0.0
    %714 = vmatmul.mubr.f32.gmra.mxu0 %v510
    %v715 = vpop.f32.mrf.mxu0
    %v716 = vadd.f32 %v441, %v715
    %v717 = vpop.f32.mrf.mxu0
    %718 = vmatprep.mubr.f32.mxu0 0.0
    %719 = vmatmul.mubr.f32.gmra.mxu0 %v513
    %v720 = vpop.f32.mrf.mxu0
    %v721 = vadd.f32 %v441, %v720
    %v722 = vpop.f32.mrf.mxu0
    %723 = vmatprep.mubr.f32.mxu0 0.0
    %724 = vmatmul.mubr.f32.gmra.mxu0 %v516
    %v725 = vpop.f32.mrf.mxu0
    %v726 = vadd.f32 %v441, %v725
    %v727 = vpop.f32.mrf.mxu0
    %728 = vmatprep.mubr.f32.mxu0 0.0
    %729 = vmatmul.mubr.f32.gmra.mxu0 %v519
    %v730 = vpop.f32.mrf.mxu0
    %v731 = vadd.f32 %v441, %v730
    %v732 = vpop.f32.mrf.mxu0
    %733 = vmatprep.mubr.f32.mxu0 0.0
    %734 = vmatmul.mubr.f32.gmra.mxu0 %v522
    %v735 = vpop.f32.mrf.mxu0
    %v736 = vadd.f32 %v441, %v735
    %v737 = vpop.f32.mrf.mxu0
    %738 = vmatprep.mubr.f32.mxu0 0.0
    %739 = vmatmul.mubr.f32.gmra.mxu0 %v525
    %v740 = vpop.f32.mrf.mxu0
    %v741 = vadd.f32 %v441, %v740
    %v742 = vpop.f32.mrf.mxu0
    %743 = vmatprep.mubr.f32.mxu0 0.0
    %744 = vmatmul.mubr.f32.gmra.mxu0 %v528
    %v745 = vpop.f32.mrf.mxu0
    %v746 = vadd.f32 %v441, %v745
    %v747 = vpop.f32.mrf.mxu0
    %748 = vmatprep.mubr.f32.mxu0 0.0
    %749 = vmatmul.mubr.f32.gmra.mxu0 %v531
    %v750 = vpop.f32.mrf.mxu0
    %v751 = vadd.f32 %v441, %v750
    %v752 = vpop.f32.mrf.mxu0
    %753 = vmatprep.mubr.f32.mxu0 0.0
    %754 = vmatmul.mubr.f32.gmra.mxu0 %v534
    %v755 = vpop.f32.mrf.mxu0
    %v756 = vadd.f32 %v441, %v755
    %v757 = vpop.f32.mrf.mxu0
    %758 = vmatprep.mubr.f32.mxu0 0.0
    %759 = vmatmul.mubr.f32.gmra.mxu0 %v537
    %v760 = vpop.f32.mrf.mxu0
    %v761 = vadd.f32 %v441, %v760
    %v762 = vpop.f32.mrf.mxu0
    %763 = vdwg.mxu0
    %vm764 = vcmask 31744
    %v765 = vsel %vm764, %v606, -inf
    %v766 = vsel %vm764, %v611, -inf
    %v767 = vmax.f32 %v765, %v766
    %v768 = vrot.slane %v767, 4
    %v769 = vmax.f32 %v767, %v768
    %v770 = vrot.slane %v769, 2
    %v771 = vmax.f32 %v769, %v770
    %v772 = vrot.slane %v771, 1
    %v773 = vmax.f32 %v771, %v772
    %v774 = vsel %vm764, %v616, -inf
    %v775 = vsel %vm764, %v621, -inf
    %v776 = vmax.f32 %v774, %v775
    %v777 = vrot.slane %v776, 4
    %v778 = vmax.f32 %v776, %v777
    %v779 = vrot.slane %v778, 2
    %v780 = vmax.f32 %v778, %v779
    %v781 = vrot.slane %v780, 1
    %v782 = vmax.f32 %v780, %v781
    %v783 = vsel %vm764, %v626, -inf
    %v784 = vsel %vm764, %v631, -inf
    %v785 = vmax.f32 %v783, %v784
    %v786 = vrot.slane %v785, 4
    %v787 = vmax.f32 %v785, %v786
    %v788 = vrot.slane %v787, 2
    %v789 = vmax.f32 %v787, %v788
    %v790 = vrot.slane %v789, 1
    %v791 = vmax.f32 %v789, %v790
    %v792 = vsel %vm764, %v636, -inf
    %v793 = vsel %vm764, %v641, -inf
    %v794 = vmax.f32 %v792, %v793
    %v795 = vrot.slane %v794, 4
    %v796 = vmax.f32 %v794, %v795
    %v797 = vrot.slane %v796, 2
    %v798 = vmax.f32 %v796, %v797
    %v799 = vrot.slane %v798, 1
    %v800 = vmax.f32 %v798, %v799
    %v801 = vsel %vm764, %v646, -inf
    %v802 = vsel %vm764, %v651, -inf
    %v803 = vmax.f32 %v801, %v802
    %v804 = vrot.slane %v803, 4
    %v805 = vmax.f32 %v803, %v804
    %v806 = vrot.slane %v805, 2
    %v807 = vmax.f32 %v805, %v806
    %v808 = vrot.slane %v807, 1
    %v809 = vmax.f32 %v807, %v808
    %v810 = vsel %vm764, %v656, -inf
    %v811 = vsel %vm764, %v661, -inf
    %v812 = vmax.f32 %v810, %v811
    %v813 = vrot.slane %v812, 4
    %v814 = vmax.f32 %v812, %v813
    %v815 = vrot.slane %v814, 2
    %v816 = vmax.f32 %v814, %v815
    %v817 = vrot.slane %v816, 1
    %v818 = vmax.f32 %v816, %v817
    %v819 = vsel %vm764, %v666, -inf
    %v820 = vsel %vm764, %v671, -inf
    %v821 = vmax.f32 %v819, %v820
    %v822 = vrot.slane %v821, 4
    %v823 = vmax.f32 %v821, %v822
    %v824 = vrot.slane %v823, 2
    %v825 = vmax.f32 %v823, %v824
    %v826 = vrot.slane %v825, 1
    %v827 = vmax.f32 %v825, %v826
    %v828 = vsel %vm764, %v676, -inf
    %v829 = vsel %vm764, %v681, -inf
    %v830 = vmax.f32 %v828, %v829
    %v831 = vrot.slane %v830, 4
    %v832 = vmax.f32 %v830, %v831
    %v833 = vrot.slane %v832, 2
    %v834 = vmax.f32 %v832, %v833
    %v835 = vrot.slane %v834, 1
    %v836 = vmax.f32 %v834, %v835
    %v837 = vsel %vm764, %v686, -inf
    %v838 = vsel %vm764, %v691, -inf
    %v839 = vmax.f32 %v837, %v838
    %v840 = vrot.slane %v839, 4
    %v841 = vmax.f32 %v839, %v840
    %v842 = vrot.slane %v841, 2
    %v843 = vmax.f32 %v841, %v842
    %v844 = vrot.slane %v843, 1
    %v845 = vmax.f32 %v843, %v844
    %v846 = vsel %vm764, %v696, -inf
    %v847 = vsel %vm764, %v701, -inf
    %v848 = vmax.f32 %v846, %v847
    %v849 = vrot.slane %v848, 4
    %v850 = vmax.f32 %v848, %v849
    %v851 = vrot.slane %v850, 2
    %v852 = vmax.f32 %v850, %v851
    %v853 = vrot.slane %v852, 1
    %v854 = vmax.f32 %v852, %v853
    %v855 = vsel %vm764, %v706, -inf
    %v856 = vsel %vm764, %v711, -inf
    %v857 = vmax.f32 %v855, %v856
    %v858 = vrot.slane %v857, 4
    %v859 = vmax.f32 %v857, %v858
    %v860 = vrot.slane %v859, 2
    %v861 = vmax.f32 %v859, %v860
    %v862 = vrot.slane %v861, 1
    %v863 = vmax.f32 %v861, %v862
    %v864 = vsel %vm764, %v716, -inf
    %v865 = vsel %vm764, %v721, -inf
    %v866 = vmax.f32 %v864, %v865
    %v867 = vrot.slane %v866, 4
    %v868 = vmax.f32 %v866, %v867
    %v869 = vrot.slane %v868, 2
    %v870 = vmax.f32 %v868, %v869
    %v871 = vrot.slane %v870, 1
    %v872 = vmax.f32 %v870, %v871
    %v873 = vsel %vm764, %v726, -inf
    %v874 = vsel %vm764, %v731, -inf
    %v875 = vmax.f32 %v873, %v874
    %v876 = vrot.slane %v875, 4
    %v877 = vmax.f32 %v875, %v876
    %v878 = vrot.slane %v877, 2
    %v879 = vmax.f32 %v877, %v878
    %v880 = vrot.slane %v879, 1
    %v881 = vmax.f32 %v879, %v880
    %v882 = vsel %vm764, %v736, -inf
    %v883 = vsel %vm764, %v741, -inf
    %v884 = vmax.f32 %v882, %v883
    %v885 = vrot.slane %v884, 4
    %v886 = vmax.f32 %v884, %v885
    %v887 = vrot.slane %v886, 2
    %v888 = vmax.f32 %v886, %v887
    %v889 = vrot.slane %v888, 1
    %v890 = vmax.f32 %v888, %v889
    %v891 = vsel %vm764, %v746, -inf
    %v892 = vsel %vm764, %v751, -inf
    %v893 = vmax.f32 %v891, %v892
    %v894 = vrot.slane %v893, 4
    %v895 = vmax.f32 %v893, %v894
    %v896 = vrot.slane %v895, 2
    %v897 = vmax.f32 %v895, %v896
    %v898 = vrot.slane %v897, 1
    %v899 = vmax.f32 %v897, %v898
    %v900 = vsel %vm764, %v756, -inf
    %v901 = vsel %vm764, %v761, -inf
    %v902 = vmax.f32 %v900, %v901
    %v903 = vrot.slane %v902, 4
    %v904 = vmax.f32 %v902, %v903
    %v905 = vrot.slane %v904, 2
    %v906 = vmax.f32 %v904, %v905
    %v907 = vrot.slane %v906, 1
    %v908 = vmax.f32 %v906, %v907
    %v909 = vsub.f32 %v606, %v773
    %v910 = vsub.f32 %v611, %v773
    %v911 = vsub.f32 %v616, %v782
    %v912 = vsub.f32 %v621, %v782
    %v913 = vsub.f32 %v626, %v791
    %v914 = vsub.f32 %v631, %v791
    %v915 = vsub.f32 %v636, %v800
    %v916 = vsub.f32 %v641, %v800
    %v917 = vsub.f32 %v646, %v809
    %v918 = vsub.f32 %v651, %v809
    %v919 = vsub.f32 %v656, %v818
    %v920 = vsub.f32 %v661, %v818
    %v921 = vsub.f32 %v666, %v827
    %v922 = vsub.f32 %v671, %v827
    %v923 = vsub.f32 %v676, %v836
    %v924 = vsub.f32 %v681, %v836
    %v925 = vsub.f32 %v686, %v845
    %v926 = vsub.f32 %v691, %v845
    %v927 = vsub.f32 %v696, %v854
    %v928 = vsub.f32 %v701, %v854
    %v929 = vsub.f32 %v706, %v863
    %v930 = vsub.f32 %v711, %v863
    %v931 = vsub.f32 %v716, %v872
    %v932 = vsub.f32 %v721, %v872
    %v933 = vsub.f32 %v726, %v881
    %v934 = vsub.f32 %v731, %v881
    %v935 = vsub.f32 %v736, %v890
    %v936 = vsub.f32 %v741, %v890
    %v937 = vsub.f32 %v746, %v899
    %v938 = vsub.f32 %v751, %v899
    %v939 = vsub.f32 %v756, %v908
    %v940 = vsub.f32 %v761, %v908
    %v941 = vmul.f32 %v909, 1.442695
    %v942 = vpow.pop %v941
    %v943 = vmul.f32 %v910, 1.442695
    %v944 = vpow.pop %v943
    %v945 = vmul.f32 %v911, 1.442695
    %v946 = vpow.pop %v945
    %v947 = vmul.f32 %v912, 1.442695
    %v948 = vpow.pop %v947
    %v949 = vmul.f32 %v913, 1.442695
    %v950 = vpow.pop %v949
    %v951 = vmul.f32 %v914, 1.442695
    %v952 = vpow.pop %v951
    %v953 = vmul.f32 %v915, 1.442695
    %v954 = vpow.pop %v953
    %v955 = vmul.f32 %v916, 1.442695
    %v956 = vpow.pop %v955
    %v957 = vmul.f32 %v917, 1.442695
    %v958 = vpow.pop %v957
    %v959 = vmul.f32 %v918, 1.442695
    %v960 = vpow.pop %v959
    %v961 = vmul.f32 %v919, 1.442695
    %v962 = vpow.pop %v961
    %v963 = vmul.f32 %v920, 1.442695
    %v964 = vpow.pop %v963
    %v965 = vmul.f32 %v921, 1.442695
    %v966 = vpow.pop %v965
    %v967 = vmul.f32 %v922, 1.442695
    %v968 = vpow.pop %v967
    %v969 = vmul.f32 %v923, 1.442695
    %v970 = vpow.pop %v969
    %v971 = vmul.f32 %v924, 1.442695
    %v972 = vpow.pop %v971
    %v973 = vmul.f32 %v925, 1.442695
    %v974 = vpow.pop %v973
    %v975 = vmul.f32 %v926, 1.442695
    %v976 = vpow.pop %v975
    %v977 = vmul.f32 %v927, 1.442695
    %v978 = vpow.pop %v977
    %v979 = vmul.f32 %v928, 1.442695
    %v980 = vpow.pop %v979
    %v981 = vmul.f32 %v929, 1.442695
    %v982 = vpow.pop %v981
    %v983 = vmul.f32 %v930, 1.442695
    %v984 = vpow.pop %v983
    %v985 = vmul.f32 %v931, 1.442695
    %v986 = vpow.pop %v985
    %v987 = vmul.f32 %v932, 1.442695
    %v988 = vpow.pop %v987
    %v989 = vmul.f32 %v933, 1.442695
    %v990 = vpow.pop %v989
    %v991 = vmul.f32 %v934, 1.442695
    %v992 = vpow.pop %v991
    %v993 = vmul.f32 %v935, 1.442695
    %v994 = vpow.pop %v993
    %v995 = vmul.f32 %v936, 1.442695
    %v996 = vpow.pop %v995
    %v997 = vmul.f32 %v937, 1.442695
    %v998 = vpow.pop %v997
    %v999 = vmul.f32 %v938, 1.442695
    %v1000 = vpow.pop %v999
    %v1001 = vmul.f32 %v939, 1.442695
    %v1002 = vpow.pop %v1001
    %v1003 = vmul.f32 %v940, 1.442695
    %v1004 = vpow.pop %v1003
    %v1005 = vsel %vm764, %v942, 0.0
    %v1006 = vsel %vm764, %v944, 0.0
    %v1007 = vadd.f32 %v1005, %v1006
    %v1008 = vrot.slane %v1007, 4
    %v1009 = vadd.f32 %v1007, %v1008
    %v1010 = vrot.slane %v1009, 2
    %v1011 = vadd.f32 %v1009, %v1010
    %v1012 = vrot.slane %v1011, 1
    %v1013 = vadd.f32 %v1011, %v1012
    %v1014 = vsel %vm764, %v946, 0.0
    %v1015 = vsel %vm764, %v948, 0.0
    %v1016 = vadd.f32 %v1014, %v1015
    %v1017 = vrot.slane %v1016, 4
    %v1018 = vadd.f32 %v1016, %v1017
    %v1019 = vrot.slane %v1018, 2
    %v1020 = vadd.f32 %v1018, %v1019
    %v1021 = vrot.slane %v1020, 1
    %v1022 = vadd.f32 %v1020, %v1021
    %v1023 = vsel %vm764, %v950, 0.0
    %v1024 = vsel %vm764, %v952, 0.0
    %v1025 = vadd.f32 %v1023, %v1024
    %v1026 = vrot.slane %v1025, 4
    %v1027 = vadd.f32 %v1025, %v1026
    %v1028 = vrot.slane %v1027, 2
    %v1029 = vadd.f32 %v1027, %v1028
    %v1030 = vrot.slane %v1029, 1
    %v1031 = vadd.f32 %v1029, %v1030
    %v1032 = vsel %vm764, %v954, 0.0
    %v1033 = vsel %vm764, %v956, 0.0
    %v1034 = vadd.f32 %v1032, %v1033
    %v1035 = vrot.slane %v1034, 4
    %v1036 = vadd.f32 %v1034, %v1035
    %v1037 = vrot.slane %v1036, 2
    %v1038 = vadd.f32 %v1036, %v1037
    %v1039 = vrot.slane %v1038, 1
    %v1040 = vadd.f32 %v1038, %v1039
    %v1041 = vsel %vm764, %v958, 0.0
    %v1042 = vsel %vm764, %v960, 0.0
    %v1043 = vadd.f32 %v1041, %v1042
    %v1044 = vrot.slane %v1043, 4
    %v1045 = vadd.f32 %v1043, %v1044
    %v1046 = vrot.slane %v1045, 2
    %v1047 = vadd.f32 %v1045, %v1046
    %v1048 = vrot.slane %v1047, 1
    %v1049 = vadd.f32 %v1047, %v1048
    %v1050 = vsel %vm764, %v962, 0.0
    %v1051 = vsel %vm764, %v964, 0.0
    %v1052 = vadd.f32 %v1050, %v1051
    %v1053 = vrot.slane %v1052, 4
    %v1054 = vadd.f32 %v1052, %v1053
    %v1055 = vrot.slane %v1054, 2
    %v1056 = vadd.f32 %v1054, %v1055
    %v1057 = vrot.slane %v1056, 1
    %v1058 = vadd.f32 %v1056, %v1057
    %v1059 = vsel %vm764, %v966, 0.0
    %v1060 = vsel %vm764, %v968, 0.0
    %v1061 = vadd.f32 %v1059, %v1060
    %v1062 = vrot.slane %v1061, 4
    %v1063 = vadd.f32 %v1061, %v1062
    %v1064 = vrot.slane %v1063, 2
    %v1065 = vadd.f32 %v1063, %v1064
    %v1066 = vrot.slane %v1065, 1
    %v1067 = vadd.f32 %v1065, %v1066
    %v1068 = vsel %vm764, %v970, 0.0
    %v1069 = vsel %vm764, %v972, 0.0
    %v1070 = vadd.f32 %v1068, %v1069
    %v1071 = vrot.slane %v1070, 4
    %v1072 = vadd.f32 %v1070, %v1071
    %v1073 = vrot.slane %v1072, 2
    %v1074 = vadd.f32 %v1072, %v1073
    %v1075 = vrot.slane %v1074, 1
    %v1076 = vadd.f32 %v1074, %v1075
    %v1077 = vsel %vm764, %v974, 0.0
    %v1078 = vsel %vm764, %v976, 0.0
    %v1079 = vadd.f32 %v1077, %v1078
    %v1080 = vrot.slane %v1079, 4
    %v1081 = vadd.f32 %v1079, %v1080
    %v1082 = vrot.slane %v1081, 2
    %v1083 = vadd.f32 %v1081, %v1082
    %v1084 = vrot.slane %v1083, 1
    %v1085 = vadd.f32 %v1083, %v1084
    %v1086 = vsel %vm764, %v978, 0.0
    %v1087 = vsel %vm764, %v980, 0.0
    %v1088 = vadd.f32 %v1086, %v1087
    %v1089 = vrot.slane %v1088, 4
    %v1090 = vadd.f32 %v1088, %v1089
    %v1091 = vrot.slane %v1090, 2
    %v1092 = vadd.f32 %v1090, %v1091
    %v1093 = vrot.slane %v1092, 1
    %v1094 = vadd.f32 %v1092, %v1093
    %v1095 = vsel %vm764, %v982, 0.0
    %v1096 = vsel %vm764, %v984, 0.0
    %v1097 = vadd.f32 %v1095, %v1096
    %v1098 = vrot.slane %v1097, 4
    %v1099 = vadd.f32 %v1097, %v1098
    %v1100 = vrot.slane %v1099, 2
    %v1101 = vadd.f32 %v1099, %v1100
    %v1102 = vrot.slane %v1101, 1
    %v1103 = vadd.f32 %v1101, %v1102
    %v1104 = vsel %vm764, %v986, 0.0
    %v1105 = vsel %vm764, %v988, 0.0
    %v1106 = vadd.f32 %v1104, %v1105
    %v1107 = vrot.slane %v1106, 4
    %v1108 = vadd.f32 %v1106, %v1107
    %v1109 = vrot.slane %v1108, 2
    %v1110 = vadd.f32 %v1108, %v1109
    %v1111 = vrot.slane %v1110, 1
    %v1112 = vadd.f32 %v1110, %v1111
    %v1113 = vsel %vm764, %v990, 0.0
    %v1114 = vsel %vm764, %v992, 0.0
    %v1115 = vadd.f32 %v1113, %v1114
    %v1116 = vrot.slane %v1115, 4
    %v1117 = vadd.f32 %v1115, %v1116
    %v1118 = vrot.slane %v1117, 2
    %v1119 = vadd.f32 %v1117, %v1118
    %v1120 = vrot.slane %v1119, 1
    %v1121 = vadd.f32 %v1119, %v1120
    %v1122 = vsel %vm764, %v994, 0.0
    %v1123 = vsel %vm764, %v996, 0.0
    %v1124 = vadd.f32 %v1122, %v1123
    %v1125 = vrot.slane %v1124, 4
    %v1126 = vadd.f32 %v1124, %v1125
    %v1127 = vrot.slane %v1126, 2
    %v1128 = vadd.f32 %v1126, %v1127
    %v1129 = vrot.slane %v1128, 1
    %v1130 = vadd.f32 %v1128, %v1129
    %v1131 = vsel %vm764, %v998, 0.0
    %v1132 = vsel %vm764, %v1000, 0.0
    %v1133 = vadd.f32 %v1131, %v1132
    %v1134 = vrot.slane %v1133, 4
    %v1135 = vadd.f32 %v1133, %v1134
    %v1136 = vrot.slane %v1135, 2
    %v1137 = vadd.f32 %v1135, %v1136
    %v1138 = vrot.slane %v1137, 1
    %v1139 = vadd.f32 %v1137, %v1138
    %v1140 = vsel %vm764, %v1002, 0.0
    %v1141 = vsel %vm764, %v1004, 0.0
    %v1142 = vadd.f32 %v1140, %v1141
    %v1143 = vrot.slane %v1142, 4
    %v1144 = vadd.f32 %v1142, %v1143
    %v1145 = vrot.slane %v1144, 2
    %v1146 = vadd.f32 %v1144, %v1145
    %v1147 = vrot.slane %v1146, 1
    %v1148 = vadd.f32 %v1146, %v1147
    %v1149 = vrcp.pop %v1013
    %v1150 = vrcp.pop %v1022
    %v1151 = vrcp.pop %v1031
    %v1152 = vrcp.pop %v1040
    %v1153 = vrcp.pop %v1049
    %v1154 = vrcp.pop %v1058
    %v1155 = vrcp.pop %v1067
    %v1156 = vrcp.pop %v1076
    %v1157 = vrcp.pop %v1085
    %v1158 = vrcp.pop %v1094
    %v1159 = vrcp.pop %v1103
    %v1160 = vrcp.pop %v1112
    %v1161 = vrcp.pop %v1121
    %v1162 = vrcp.pop %v1130
    %v1163 = vrcp.pop %v1139
    %v1164 = vrcp.pop %v1148
    %v1165 = vmul.f32 %v942, %v1149
    %v1166 = vmul.f32 %v944, %v1149
    %v1167 = vmul.f32 %v946, %v1150
    %v1168 = vmul.f32 %v948, %v1150
    %v1169 = vmul.f32 %v950, %v1151
    %v1170 = vmul.f32 %v952, %v1151
    %v1171 = vmul.f32 %v954, %v1152
    %v1172 = vmul.f32 %v956, %v1152
    %v1173 = vmul.f32 %v958, %v1153
    %v1174 = vmul.f32 %v960, %v1153
    %v1175 = vmul.f32 %v962, %v1154
    %v1176 = vmul.f32 %v964, %v1154
    %v1177 = vmul.f32 %v966, %v1155
    %v1178 = vmul.f32 %v968, %v1155
    %v1179 = vmul.f32 %v970, %v1156
    %v1180 = vmul.f32 %v972, %v1156
    %v1181 = vmul.f32 %v974, %v1157
    %v1182 = vmul.f32 %v976, %v1157
    %v1183 = vmul.f32 %v978, %v1158
    %v1184 = vmul.f32 %v980, %v1158
    %v1185 = vmul.f32 %v982, %v1159
    %v1186 = vmul.f32 %v984, %v1159
    %v1187 = vmul.f32 %v986, %v1160
    %v1188 = vmul.f32 %v988, %v1160
    %v1189 = vmul.f32 %v990, %v1161
    %v1190 = vmul.f32 %v992, %v1161
    %v1191 = vmul.f32 %v994, %v1162
    %v1192 = vmul.f32 %v996, %v1162
    %v1193 = vmul.f32 %v998, %v1163
    %v1194 = vmul.f32 %v1000, %v1163
    %v1195 = vmul.f32 %v1002, %v1164
    %v1196 = vmul.f32 %v1004, %v1164
    %v1197 = vsel %vm764, %v1165, 0.0
    %1198 = vadd.xlane.f32.xlu0 %v1197
    %v1199 = vpop.xlane.xlu0 %1198
    %v1200 = vsel %vm764, %v1166, 0.0
    %1201 = vadd.xlane.f32.xlu0 %v1200
    %v1202 = vpop.xlane.xlu0 %1201
    %v1203 = vsel %vm764, %v1167, 0.0
    %1204 = vadd.xlane.f32.xlu0 %v1203
    %v1205 = vpop.xlane.xlu0 %1204
    %v1206 = vsel %vm764, %v1168, 0.0
    %1207 = vadd.xlane.f32.xlu0 %v1206
    %v1208 = vpop.xlane.xlu0 %1207
    %v1209 = vsel %vm764, %v1169, 0.0
    %1210 = vadd.xlane.f32.xlu0 %v1209
    %v1211 = vpop.xlane.xlu0 %1210
    %v1212 = vsel %vm764, %v1170, 0.0
    %1213 = vadd.xlane.f32.xlu0 %v1212
    %v1214 = vpop.xlane.xlu0 %1213
    %v1215 = vsel %vm764, %v1171, 0.0
    %1216 = vadd.xlane.f32.xlu0 %v1215
    %v1217 = vpop.xlane.xlu0 %1216
    %v1218 = vsel %vm764, %v1172, 0.0
    %1219 = vadd.xlane.f32.xlu0 %v1218
    %v1220 = vpop.xlane.xlu0 %1219
    %v1221 = vsel %vm764, %v1173, 0.0
    %1222 = vadd.xlane.f32.xlu0 %v1221
    %v1223 = vpop.xlane.xlu0 %1222
    %v1224 = vsel %vm764, %v1174, 0.0
    %1225 = vadd.xlane.f32.xlu0 %v1224
    %v1226 = vpop.xlane.xlu0 %1225
    %v1227 = vsel %vm764, %v1175, 0.0
    %1228 = vadd.xlane.f32.xlu0 %v1227
    %v1229 = vpop.xlane.xlu0 %1228
    %v1230 = vsel %vm764, %v1176, 0.0
    %1231 = vadd.xlane.f32.xlu0 %v1230
    %v1232 = vpop.xlane.xlu0 %1231
    %v1233 = vsel %vm764, %v1177, 0.0
    %1234 = vadd.xlane.f32.xlu0 %v1233
    %v1235 = vpop.xlane.xlu0 %1234
    %v1236 = vsel %vm764, %v1178, 0.0
    %1237 = vadd.xlane.f32.xlu0 %v1236
    %v1238 = vpop.xlane.xlu0 %1237
    %v1239 = vsel %vm764, %v1179, 0.0
    %1240 = vadd.xlane.f32.xlu0 %v1239
    %v1241 = vpop.xlane.xlu0 %1240
    %v1242 = vsel %vm764, %v1180, 0.0
    %1243 = vadd.xlane.f32.xlu0 %v1242
    %v1244 = vpop.xlane.xlu0 %1243
    %v1245 = vsel %vm764, %v1181, 0.0
    %1246 = vadd.xlane.f32.xlu0 %v1245
    %v1247 = vpop.xlane.xlu0 %1246
    %v1248 = vsel %vm764, %v1182, 0.0
    %1249 = vadd.xlane.f32.xlu0 %v1248
    %v1250 = vpop.xlane.xlu0 %1249
    %v1251 = vsel %vm764, %v1183, 0.0
    %1252 = vadd.xlane.f32.xlu0 %v1251
    %v1253 = vpop.xlane.xlu0 %1252
    %v1254 = vsel %vm764, %v1184, 0.0
    %1255 = vadd.xlane.f32.xlu0 %v1254
    %v1256 = vpop.xlane.xlu0 %1255
    %v1257 = vsel %vm764, %v1185, 0.0
    %1258 = vadd.xlane.f32.xlu0 %v1257
    %v1259 = vpop.xlane.xlu0 %1258
    %v1260 = vsel %vm764, %v1186, 0.0
    %1261 = vadd.xlane.f32.xlu0 %v1260
    %v1262 = vpop.xlane.xlu0 %1261
    %v1263 = vsel %vm764, %v1187, 0.0
    %1264 = vadd.xlane.f32.xlu0 %v1263
    %v1265 = vpop.xlane.xlu0 %1264
    %v1266 = vsel %vm764, %v1188, 0.0
    %1267 = vadd.xlane.f32.xlu0 %v1266
    %v1268 = vpop.xlane.xlu0 %1267
    %v1269 = vsel %vm764, %v1189, 0.0
    %1270 = vadd.xlane.f32.xlu0 %v1269
    %v1271 = vpop.xlane.xlu0 %1270
    %v1272 = vsel %vm764, %v1190, 0.0
    %1273 = vadd.xlane.f32.xlu0 %v1272
    %v1274 = vpop.xlane.xlu0 %1273
    %v1275 = vsel %vm764, %v1191, 0.0
    %1276 = vadd.xlane.f32.xlu0 %v1275
    %v1277 = vpop.xlane.xlu0 %1276
    %v1278 = vsel %vm764, %v1192, 0.0
    %1279 = vadd.xlane.f32.xlu0 %v1278
    %v1280 = vpop.xlane.xlu0 %1279
    %v1281 = vsel %vm764, %v1193, 0.0
    %1282 = vadd.xlane.f32.xlu0 %v1281
    %v1283 = vpop.xlane.xlu0 %1282
    %v1284 = vsel %vm764, %v1194, 0.0
    %1285 = vadd.xlane.f32.xlu0 %v1284
    %v1286 = vpop.xlane.xlu0 %1285
    %v1287 = vsel %vm764, %v1195, 0.0
    %1288 = vadd.xlane.f32.xlu0 %v1287
    %v1289 = vpop.xlane.xlu0 %1288
    %v1290 = vsel %vm764, %v1196, 0.0
    %1291 = vadd.xlane.f32.xlu0 %v1290
    %v1292 = vpop.xlane.xlu0 %1291
    %v1293 = vrcp.pop 4.0
    %v1294 = vmul.f32 %v1199, %v1293
    %v1295 = vmul.f32 %v1202, %v1293
    %v1296 = vmul.f32 %v1205, %v1293
    %v1297 = vmul.f32 %v1208, %v1293
    %v1298 = vmul.f32 %v1211, %v1293
    %v1299 = vmul.f32 %v1214, %v1293
    %v1300 = vmul.f32 %v1217, %v1293
    %v1301 = vmul.f32 %v1220, %v1293
    %v1302 = vmul.f32 %v1223, %v1293
    %v1303 = vmul.f32 %v1226, %v1293
    %v1304 = vmul.f32 %v1229, %v1293
    %v1305 = vmul.f32 %v1232, %v1293
    %v1306 = vmul.f32 %v1235, %v1293
    %v1307 = vmul.f32 %v1238, %v1293
    %v1308 = vmul.f32 %v1241, %v1293
    %v1309 = vmul.f32 %v1244, %v1293
    %v1310 = vmul.f32 %v1247, %v1293
    %v1311 = vmul.f32 %v1250, %v1293
    %v1312 = vmul.f32 %v1253, %v1293
    %v1313 = vmul.f32 %v1256, %v1293
    %v1314 = vmul.f32 %v1259, %v1293
    %v1315 = vmul.f32 %v1262, %v1293
    %v1316 = vmul.f32 %v1265, %v1293
    %v1317 = vmul.f32 %v1268, %v1293
    %v1318 = vmul.f32 %v1271, %v1293
    %v1319 = vmul.f32 %v1274, %v1293
    %v1320 = vmul.f32 %v1277, %v1293
    %v1321 = vmul.f32 %v1280, %v1293
    %v1322 = vmul.f32 %v1283, %v1293
    %v1323 = vmul.f32 %v1286, %v1293
    %v1324 = vmul.f32 %v1289, %v1293
    %v1325 = vmul.f32 %v1292, %v1293
    %v1326 = vmul.f32 %v35, %v1294
    %v1327 = vmul.f32 %v36, %v1295
    %v1328 = vmul.f32 %v37, %v1296
    %v1329 = vmul.f32 %v38, %v1297
    %v1330 = vmul.f32 %v39, %v1298
    %v1331 = vmul.f32 %v40, %v1299
    %v1332 = vmul.f32 %v41, %v1300
    %v1333 = vmul.f32 %v42, %v1301
    %v1334 = vmul.f32 %v43, %v1302
    %v1335 = vmul.f32 %v44, %v1303
    %v1336 = vmul.f32 %v45, %v1304
    %v1337 = vmul.f32 %v46, %v1305
    %v1338 = vmul.f32 %v47, %v1306
    %v1339 = vmul.f32 %v48, %v1307
    %v1340 = vmul.f32 %v49, %v1308
    %v1341 = vmul.f32 %v50, %v1309
    %v1342 = vmul.f32 %v51, %v1310
    %v1343 = vmul.f32 %v52, %v1311
    %v1344 = vmul.f32 %v53, %v1312
    %v1345 = vmul.f32 %v54, %v1313
    %v1346 = vmul.f32 %v55, %v1314
    %v1347 = vmul.f32 %v56, %v1315
    %v1348 = vmul.f32 %v57, %v1316
    %v1349 = vmul.f32 %v58, %v1317
    %v1350 = vmul.f32 %v59, %v1318
    %v1351 = vmul.f32 %v60, %v1319
    %v1352 = vmul.f32 %v61, %v1320
    %v1353 = vmul.f32 %v62, %v1321
    %v1354 = vmul.f32 %v63, %v1322
    %v1355 = vmul.f32 %v64, %v1323
    %v1356 = vmul.f32 %v65, %v1324
    %v1357 = vmul.f32 %v66, %v1325
    %v1358 = vsel %vm78, %v1326, 0.0
    %v1359 = vsel %vm78, %v1327, 0.0
    %v1360 = vadd.f32 %v1358, %v1359
    %v1361 = vrot.slane %v1360, 4
    %v1362 = vadd.f32 %v1360, %v1361
    %v1363 = vrot.slane %v1362, 2
    %v1364 = vadd.f32 %v1362, %v1363
    %v1365 = vrot.slane %v1364, 1
    %v1366 = vadd.f32 %v1364, %v1365
    %v1367 = vsel %vm78, %v1328, 0.0
    %v1368 = vsel %vm78, %v1329, 0.0
    %v1369 = vadd.f32 %v1367, %v1368
    %v1370 = vrot.slane %v1369, 4
    %v1371 = vadd.f32 %v1369, %v1370
    %v1372 = vrot.slane %v1371, 2
    %v1373 = vadd.f32 %v1371, %v1372
    %v1374 = vrot.slane %v1373, 1
    %v1375 = vadd.f32 %v1373, %v1374
    %v1376 = vsel %vm78, %v1330, 0.0
    %v1377 = vsel %vm78, %v1331, 0.0
    %v1378 = vadd.f32 %v1376, %v1377
    %v1379 = vrot.slane %v1378, 4
    %v1380 = vadd.f32 %v1378, %v1379
    %v1381 = vrot.slane %v1380, 2
    %v1382 = vadd.f32 %v1380, %v1381
    %v1383 = vrot.slane %v1382, 1
    %v1384 = vadd.f32 %v1382, %v1383
    %v1385 = vsel %vm78, %v1332, 0.0
    %v1386 = vsel %vm78, %v1333, 0.0
    %v1387 = vadd.f32 %v1385, %v1386
    %v1388 = vrot.slane %v1387, 4
    %v1389 = vadd.f32 %v1387, %v1388
    %v1390 = vrot.slane %v1389, 2
    %v1391 = vadd.f32 %v1389, %v1390
    %v1392 = vrot.slane %v1391, 1
    %v1393 = vadd.f32 %v1391, %v1392
    %v1394 = vsel %vm78, %v1334, 0.0
    %v1395 = vsel %vm78, %v1335, 0.0
    %v1396 = vadd.f32 %v1394, %v1395
    %v1397 = vrot.slane %v1396, 4
    %v1398 = vadd.f32 %v1396, %v1397
    %v1399 = vrot.slane %v1398, 2
    %v1400 = vadd.f32 %v1398, %v1399
    %v1401 = vrot.slane %v1400, 1
    %v1402 = vadd.f32 %v1400, %v1401
    %v1403 = vsel %vm78, %v1336, 0.0
    %v1404 = vsel %vm78, %v1337, 0.0
    %v1405 = vadd.f32 %v1403, %v1404
    %v1406 = vrot.slane %v1405, 4
    %v1407 = vadd.f32 %v1405, %v1406
    %v1408 = vrot.slane %v1407, 2
    %v1409 = vadd.f32 %v1407, %v1408
    %v1410 = vrot.slane %v1409, 1
    %v1411 = vadd.f32 %v1409, %v1410
    %v1412 = vsel %vm78, %v1338, 0.0
    %v1413 = vsel %vm78, %v1339, 0.0
    %v1414 = vadd.f32 %v1412, %v1413
    %v1415 = vrot.slane %v1414, 4
    %v1416 = vadd.f32 %v1414, %v1415
    %v1417 = vrot.slane %v1416, 2
    %v1418 = vadd.f32 %v1416, %v1417
    %v1419 = vrot.slane %v1418, 1
    %v1420 = vadd.f32 %v1418, %v1419
    %v1421 = vsel %vm78, %v1340, 0.0
    %v1422 = vsel %vm78, %v1341, 0.0
    %v1423 = vadd.f32 %v1421, %v1422
    %v1424 = vrot.slane %v1423, 4
    %v1425 = vadd.f32 %v1423, %v1424
    %v1426 = vrot.slane %v1425, 2
    %v1427 = vadd.f32 %v1425, %v1426
    %v1428 = vrot.slane %v1427, 1
    %v1429 = vadd.f32 %v1427, %v1428
    %v1430 = vsel %vm78, %v1342, 0.0
    %v1431 = vsel %vm78, %v1343, 0.0
    %v1432 = vadd.f32 %v1430, %v1431
    %v1433 = vrot.slane %v1432, 4
    %v1434 = vadd.f32 %v1432, %v1433
    %v1435 = vrot.slane %v1434, 2
    %v1436 = vadd.f32 %v1434, %v1435
    %v1437 = vrot.slane %v1436, 1
    %v1438 = vadd.f32 %v1436, %v1437
    %v1439 = vsel %vm78, %v1344, 0.0
    %v1440 = vsel %vm78, %v1345, 0.0
    %v1441 = vadd.f32 %v1439, %v1440
    %v1442 = vrot.slane %v1441, 4
    %v1443 = vadd.f32 %v1441, %v1442
    %v1444 = vrot.slane %v1443, 2
    %v1445 = vadd.f32 %v1443, %v1444
    %v1446 = vrot.slane %v1445, 1
    %v1447 = vadd.f32 %v1445, %v1446
    %v1448 = vsel %vm78, %v1346, 0.0
    %v1449 = vsel %vm78, %v1347, 0.0
    %v1450 = vadd.f32 %v1448, %v1449
    %v1451 = vrot.slane %v1450, 4
    %v1452 = vadd.f32 %v1450, %v1451
    %v1453 = vrot.slane %v1452, 2
    %v1454 = vadd.f32 %v1452, %v1453
    %v1455 = vrot.slane %v1454, 1
    %v1456 = vadd.f32 %v1454, %v1455
    %v1457 = vsel %vm78, %v1348, 0.0
    %v1458 = vsel %vm78, %v1349, 0.0
    %v1459 = vadd.f32 %v1457, %v1458
    %v1460 = vrot.slane %v1459, 4
    %v1461 = vadd.f32 %v1459, %v1460
    %v1462 = vrot.slane %v1461, 2
    %v1463 = vadd.f32 %v1461, %v1462
    %v1464 = vrot.slane %v1463, 1
    %v1465 = vadd.f32 %v1463, %v1464
    %v1466 = vsel %vm78, %v1350, 0.0
    %v1467 = vsel %vm78, %v1351, 0.0
    %v1468 = vadd.f32 %v1466, %v1467
    %v1469 = vrot.slane %v1468, 4
    %v1470 = vadd.f32 %v1468, %v1469
    %v1471 = vrot.slane %v1470, 2
    %v1472 = vadd.f32 %v1470, %v1471
    %v1473 = vrot.slane %v1472, 1
    %v1474 = vadd.f32 %v1472, %v1473
    %v1475 = vsel %vm78, %v1352, 0.0
    %v1476 = vsel %vm78, %v1353, 0.0
    %v1477 = vadd.f32 %v1475, %v1476
    %v1478 = vrot.slane %v1477, 4
    %v1479 = vadd.f32 %v1477, %v1478
    %v1480 = vrot.slane %v1479, 2
    %v1481 = vadd.f32 %v1479, %v1480
    %v1482 = vrot.slane %v1481, 1
    %v1483 = vadd.f32 %v1481, %v1482
    %v1484 = vsel %vm78, %v1354, 0.0
    %v1485 = vsel %vm78, %v1355, 0.0
    %v1486 = vadd.f32 %v1484, %v1485
    %v1487 = vrot.slane %v1486, 4
    %v1488 = vadd.f32 %v1486, %v1487
    %v1489 = vrot.slane %v1488, 2
    %v1490 = vadd.f32 %v1488, %v1489
    %v1491 = vrot.slane %v1490, 1
    %v1492 = vadd.f32 %v1490, %v1491
    %v1493 = vsel %vm78, %v1356, 0.0
    %v1494 = vsel %vm78, %v1357, 0.0
    %v1495 = vadd.f32 %v1493, %v1494
    %v1496 = vrot.slane %v1495, 4
    %v1497 = vadd.f32 %v1495, %v1496
    %v1498 = vrot.slane %v1497, 2
    %v1499 = vadd.f32 %v1497, %v1498
    %v1500 = vrot.slane %v1499, 1
    %v1501 = vadd.f32 %v1499, %v1500
    %vm1518 = vcmask 1041409
    %v1519 = vsel %vm1518, %v1375, %v1366
    %vm1520 = vcmask 1042434
    %v1521 = vsel %vm1520, %v1384, %v1519
    %vm1522 = vcmask 1043459
    %v1523 = vsel %vm1522, %v1393, %v1521
    %vm1524 = vcmask 1044484
    %v1525 = vsel %vm1524, %v1402, %v1523
    %vm1526 = vcmask 1045509
    %v1527 = vsel %vm1526, %v1411, %v1525
    %vm1528 = vcmask 1046534
    %v1529 = vsel %vm1528, %v1420, %v1527
    %vm1530 = vcmask 1047559
    %v1531 = vsel %vm1530, %v1429, %v1529
    %v1532 = vsel %vm1518, %v1447, %v1438
    %v1533 = vsel %vm1520, %v1456, %v1532
    %v1534 = vsel %vm1522, %v1465, %v1533
    %v1535 = vsel %vm1524, %v1474, %v1534
    %v1536 = vsel %vm1526, %v1483, %v1535
    %v1537 = vsel %vm1528, %v1492, %v1536
    %v1538 = vsel %vm1530, %v1501, %v1537
    %1541 = vst.msk [vmem:[#allocation5] sm:$0xff] %vm78, %v1531
    %1542 = vst.msk [vmem:[#allocation5 + $0x8] sm:$0xff] %vm78, %v1538
    // Predicated region
    $region26: #{tpu_custom_call.1} parent=1 // pred_check
      _
    $region27: #{tpu_custom_call.1} parent=1 // pred_check_branch
      %1544 = sbr.rel (0) target = $region29
    $region28: #{tpu_custom_call.1} parent=1 // pred_region
      %s1546 = ssub.s32 256, 256
      %1547 = vsyncadd [#allocation4], %s1546
      %s1548 = sshll.u32 [#allocation5], 4
      %s1549 = int_to_ptr.vmem [resolvable:$true] %s1548
      %1554 = dma.vmem_to_hbm [thread:$0]  %s1549, 256, %s5, [#allocation4], 128, 128, 8
    $region29: #{tpu_custom_call.1} parent=1 // pred_fallthru
      _
    // Predicated region
    $region30: #{tpu_custom_call.1} parent=1 // pred_check
      _
    $region31: #{tpu_custom_call.1} parent=1 // pred_check_branch
      %1556 = sbr.rel (0) target = $region33
    $region32: #{tpu_custom_call.1} parent=1 // pred_region
      %1557 = dma.done [#allocation4], 256
    $region33: #{tpu_custom_call.1} parent=1 // pred_fallthru
      _
    %1558 = vsyncpa [#allocation3], 1
    %1559 = vsyncpa [#allocation4], 1

</llo_original>
